<compile_context>
chip_gen: v6e
topology: v6e:2x2x1
jax: 0.10.0
libtpu: 0.0.40
codegen_flags: <defaults>
</compile_context>

<pallas_src>
import functools

import jax
import jax.numpy as jnp
from jax.experimental import pallas as pl
from jax.experimental.pallas import tpu as pltpu

CHUNK = 8 * 128                      # one f32 vreg worth of elements
TARGET_BLOCK_BYTES = 2 << 20         # ~2 MiB of each input per grid step


def _combined_loss_kernel(pred_ref, target_ref, out_ref, *, alpha,
                          chunk_block, inner, n_chunks, need_mask):
    j = pl.program_id(1)

    # Output block is resident across the inner ("arbitrary") axis -> use it
    # as the per-core (8, 128) lane-partial accumulator.
    @pl.when(j == 0)
    def _():
        out_ref[...] = jnp.zeros_like(out_ref)

    d = pred_ref[...].astype(jnp.float32) - target_ref[...].astype(jnp.float32)
    a = jnp.abs(d)
    # alpha*|d| + (1-alpha)*d^2  ==  |d| * (alpha + (1-alpha)*|d|)
    comb = a * (alpha + (1.0 - alpha) * a)

    if need_mask:
        # Zero out chunks that lie past the real data: the ragged tail of the
        # last block (which reads past the (n_chunks, 8, 128) view) and the
        # clamped duplicate block(s) of the second split.
        base = (pl.program_id(0) * inner + j) * chunk_block
        chunk_ids = jax.lax.broadcasted_iota(jnp.int32, comb.shape, 0) + base
        comb = jnp.where(chunk_ids < n_chunks, comb, 0.0)

    # Leading-axis reduction: cross-vreg VPU adds only (no XLU in the hot loop).
    out_ref[...] += comb.sum(axis=0, keepdims=True)


def combined_loss(pred, target, alpha: float = 0.5,
                  target_block_bytes: int = TARGET_BLOCK_BYTES):
    assert pred.shape == target.shape
    n = int(pred.size)
    itemsize = jnp.dtype(pred.dtype).itemsize

    flat_p = pred.reshape(-1)
    flat_t = target.reshape(-1)
    pad = (-n) % CHUNK
    if pad:
        # Rare path: zero-pad to a multiple of 1024 so the (n_chunks, 8, 128)
        # view exists.  Zeros contribute nothing to either sum.
        flat_p = jnp.pad(flat_p, (0, pad))
        flat_t = jnp.pad(flat_t, (0, pad))
    n_chunks = (n + pad) // CHUNK
    p3 = flat_p.reshape(n_chunks, 8, 128)
    t3 = flat_t.reshape(n_chunks, 8, 128)

    # Block size chosen by bytes (bf16/fp8 inputs get proportionally more
    # chunks per step); capped at the full array for small inputs.
    chunk_block = max(1, min(n_chunks, target_block_bytes // (CHUNK * itemsize)))
    num_blocks = pl.cdiv(n_chunks, chunk_block)
    splits = 2 if num_blocks >= 2 else 1          # feed both v7x TensorCores
    inner = pl.cdiv(num_blocks, splits)
    # Mask whenever the grid's chunk coverage exceeds the real chunk count
    # (ragged last block reads undefined data; clamped blocks are duplicates).
    need_mask = splits * inner * chunk_block > n_chunks

    def in_map(c, j):
        # Clamp so the (possibly duplicated) trailing block of the second split
        # stays in-bounds; its contribution is masked to zero in the kernel.
        return (jnp.minimum(c * inner + j, num_blocks - 1), 0, 0)

    kernel = functools.partial(
        _combined_loss_kernel, alpha=float(alpha), chunk_block=int(chunk_block),
        inner=int(inner), n_chunks=int(n_chunks), need_mask=bool(need_mask))

    partials = pl.pallas_call(
        kernel,
        out_shape=jax.ShapeDtypeStruct((splits, 8, 128), jnp.float32),
        grid_spec=pltpu.PrefetchScalarGridSpec(
            num_scalar_prefetch=0,
            grid=(splits, inner),
            in_specs=[
                pl.BlockSpec((chunk_block, 8, 128), in_map),
                pl.BlockSpec((chunk_block, 8, 128), in_map),
            ],
            out_specs=pl.BlockSpec((1, 8, 128), lambda c, j: (c, 0, 0)),
        ),
        compiler_params=pltpu.CompilerParams(
            dimension_semantics=("parallel", "arbitrary")),
        cost_estimate=pl.CostEstimate(
            flops=6 * n,
            transcendentals=0,
            bytes_accessed=2 * n * itemsize + splits * CHUNK * 4),
    )(p3, t3)

    # One tiny cross-lane reduce + mean normalization outside the hot loop.
    return jnp.sum(partials) * jnp.float32(1.0 / n)


def _ref_loss(pred, target, alpha):
    d = pred.astype(jnp.float32) - target.astype(jnp.float32)
    return alpha * jnp.mean(jnp.abs(d)) + (1.0 - alpha) * jnp.mean(d * d)


if __name__ == "__main__":
    key = jax.random.PRNGKey(0)
    alpha = 0.5

    # Primary check: the module's natural small shape.
    kp, kt, kp2, kt2, kp3, kt3 = jax.random.split(key, 6)
    shape = (2, 4, 16, 16)
    pred = jax.random.normal(kp, shape, dtype=jnp.float32)
    target = jax.random.normal(kt, shape, dtype=jnp.float32)
    loss = jax.block_until_ready(combined_loss(pred, target, alpha=alpha))
    ref = _ref_loss(pred, target, alpha)
    assert jnp.allclose(loss, ref, rtol=1e-5, atol=1e-6), (loss, ref)

    # Ragged (pad) path.
    pred_r = jax.random.normal(kp2, (3, 5, 7), dtype=jnp.float32)
    target_r = jax.random.normal(kt2, (3, 5, 7), dtype=jnp.float32)
    loss_r = jax.block_until_ready(combined_loss(pred_r, target_r, alpha=alpha))
    ref_r = _ref_loss(pred_r, target_r, alpha)
    assert jnp.allclose(loss_r, ref_r, rtol=1e-5, atol=1e-6), (loss_r, ref_r)

    # Split + mask path (small target block bytes forces multi-block grid),
    # with bf16 inputs to exercise the in-kernel cast.
    pred_m = jax.random.normal(kp3, (5, 32, 32), dtype=jnp.bfloat16)
    target_m = jax.random.normal(kt3, (5, 32, 32), dtype=jnp.bfloat16)
    loss_m = jax.block_until_ready(
        combined_loss(pred_m, target_m, alpha=0.3,
                      target_block_bytes=2 * CHUNK * 2))
    ref_m = _ref_loss(pred_m, target_m, 0.3)
    assert jnp.allclose(loss_m, ref_m, rtol=1e-3, atol=1e-4), (loss_m, ref_m)

    print("KERNEL_OK")
</pallas_src>

<mosaic_0001>
module attributes {stable_mosaic.version = 11 : i64} {
  func.func @_combined_loss_kernel(%arg0: i32, %arg1: i32, %arg2: memref<2x8x128xf32, #tpu.memory_space<vmem>>, %arg3: memref<2x8x128xf32, #tpu.memory_space<vmem>>, %arg4: memref<1x8x128xf32, #tpu.memory_space<vmem>>) attributes {dimension_semantics = [#tpu.dimension_semantics<parallel>, #tpu.dimension_semantics<arbitrary>], iteration_bounds = array<i64: 1, 1>, scalar_prefetch = 0 : i64, scratch_operands = 0 : i64, tpu.core_type = #tpu.core_type<tc>, window_params = [{transform_indices = @transform_0, window_bounds = array<i64: 2, 8, 128>}, {transform_indices = @transform_1, window_bounds = array<i64: 2, 8, 128>}, {transform_indices = @transform_2, window_bounds = array<i64: 1, 8, 128>}]} {
    %c0_i32 = arith.constant 0 : i32
    %0 = arith.cmpi eq, %arg1, %c0_i32 : i32
    %1 = arith.extui %0 : i1 to i32
    %c0_i32_0 = arith.constant 0 : i32
    %2 = arith.cmpi ne, %1, %c0_i32_0 : i32
    scf.if %2 {
      %cst_14 = arith.constant 0.000000e+00 : f32
      %17 = vector.broadcast %cst_14 : f32 to vector<1x8x128xf32>
      %c0_15 = arith.constant 0 : index
      %c0_16 = arith.constant 0 : index
      %c0_17 = arith.constant 0 : index
      %18 = vector.load %arg4[%c0_15, %c0_16, %c0_17] : memref<1x8x128xf32, #tpu.memory_space<vmem>>, vector<1x8x128xf32>
      tpu.vector_store %arg4[%c0_15, %c0_16, %c0_17], %17 {strides = array<i32>} : memref<1x8x128xf32, #tpu.memory_space<vmem>>, vector<1x8x128xf32>,
    } else {
    }
    %c0 = arith.constant 0 : index
    %c0_1 = arith.constant 0 : index
    %c0_2 = arith.constant 0 : index
    %3 = vector.load %arg2[%c0, %c0_1, %c0_2] : memref<2x8x128xf32, #tpu.memory_space<vmem>>, vector<2x8x128xf32>
    %c0_3 = arith.constant 0 : index
    %c0_4 = arith.constant 0 : index
    %c0_5 = arith.constant 0 : index
    %4 = vector.load %arg3[%c0_3, %c0_4, %c0_5] : memref<2x8x128xf32, #tpu.memory_space<vmem>>, vector<2x8x128xf32>
    %5 = arith.subf %3, %4 : vector<2x8x128xf32>
    %6 = math.absf %5 : vector<2x8x128xf32>
    %cst = arith.constant 5.000000e-01 : f32
    %7 = vector.broadcast %cst : f32 to vector<2x8x128xf32>
    %8 = arith.mulf %7, %6 : vector<2x8x128xf32>
    %cst_6 = arith.constant 5.000000e-01 : f32
    %9 = vector.broadcast %cst_6 : f32 to vector<2x8x128xf32>
    %10 = arith.addf %9, %8 : vector<2x8x128xf32>
    %11 = arith.mulf %6, %10 : vector<2x8x128xf32>
    %c0_7 = arith.constant 0 : index
    %c0_8 = arith.constant 0 : index
    %c0_9 = arith.constant 0 : index
    %12 = vector.load %arg4[%c0_7, %c0_8, %c0_9] : memref<1x8x128xf32, #tpu.memory_space<vmem>>, vector<1x8x128xf32>
    %cst_10 = arith.constant dense<0.000000e+00> : vector<8x128xf32>
    %13 = vector.multi_reduction <add>, %11, %cst_10 [0] : vector<2x8x128xf32> to vector<8x128xf32>
    %14 = vector.shape_cast %13 : vector<8x128xf32> to vector<1x8x128xf32>
    %15 = arith.addf %12, %14 : vector<1x8x128xf32>
    %c0_11 = arith.constant 0 : index
    %c0_12 = arith.constant 0 : index
    %c0_13 = arith.constant 0 : index
    %16 = vector.load %arg4[%c0_11, %c0_12, %c0_13] : memref<1x8x128xf32, #tpu.memory_space<vmem>>, vector<1x8x128xf32>
    tpu.vector_store %arg4[%c0_11, %c0_12, %c0_13], %15 {strides = array<i32>} : memref<1x8x128xf32, #tpu.memory_space<vmem>>, vector<1x8x128xf32>,
    return
  }
  func.func @transform_0(%arg0: i32, %arg1: i32) -> (i32, i32, i32) {
    %c1_i32 = arith.constant 1 : i32
    %0 = arith.muli %arg0, %c1_i32 : i32
    %1 = arith.addi %0, %arg1 : i32
    %c0_i32 = arith.constant 0 : i32
    %2 = arith.minsi %1, %c0_i32 : i32
    %c0_i32_0 = arith.constant 0 : i32
    %c0_i32_1 = arith.constant 0 : i32
    %c0_i32_2 = arith.constant 0 : i32
    return %2, %c0_i32_0, %c0_i32_1 : i32, i32, i32
  }
  func.func @transform_1(%arg0: i32, %arg1: i32) -> (i32, i32, i32) {
    %c1_i32 = arith.constant 1 : i32
    %0 = arith.muli %arg0, %c1_i32 : i32
    %1 = arith.addi %0, %arg1 : i32
    %c0_i32 = arith.constant 0 : i32
    %2 = arith.minsi %1, %c0_i32 : i32
    %c0_i32_0 = arith.constant 0 : i32
    %c0_i32_1 = arith.constant 0 : i32
    %c0_i32_2 = arith.constant 0 : i32
    return %2, %c0_i32_0, %c0_i32_1 : i32, i32, i32
  }
  func.func @transform_2(%arg0: i32, %arg1: i32) -> (i32, i32, i32) {
    %c0_i32 = arith.constant 0 : i32
    %c0_i32_0 = arith.constant 0 : i32
    %c0_i32_1 = arith.constant 0 : i32
    return %arg0, %c0_i32, %c0_i32_0 : i32, i32, i32
  }
}

</mosaic_0001>

<llo_original>
// kernel: tpu_custom_call.1
$region0: #{tpu_custom_call.1}
  #allocation0 [shape = 'u32[]', space=smem, size = 0x4, offset = 0x4, fixed_abs, tag = 'smem constant byte address 0x4 - core index']
  #allocation1 [shape = 'u32[144,128]{1,0:T(1,128)}', space=vmem, size = 0x12000, scoped, tag = 'internal scratch']
  %s0 = inlined_call_operand.hbm [shape: f32[2,8,128], index: 0, kind: input, shape index: {}]
  %s1 = inlined_call_operand.hbm [shape: f32[2,8,128], index: 1, kind: input, shape index: {}]
  %s2 = inlined_call_operand.hbm [shape: f32[1,8,128], index: 2, kind: output, shape index: {}]
  %s3 = sld [smem:[#allocation0]]
  $region30: #{tpu_custom_call.1} parent=0
    _
  %s5 = ssub.s32 1, %s3
  %s6 = scalar_select 0, %s5, %s3
  $region1: #{tpu_custom_call.1} parent=0
    #allocation2 [shape = 'u8[8192]{0}', space=vmem, size = 0x2000, scoped, tag = 'input window, operand 0, single buffered']
    #allocation3 [shape = 's32[1]{0}', space=sflag, size = 0x4, scoped, tag = 'scoped memory for tpu_custom_call.1']
    #allocation4 [shape = 's32[1]{0}', space=sflag, size = 0x4, scoped, tag = 'scoped memory for tpu_custom_call.1']
    #allocation5 [shape = 'u8[8192]{0}', space=vmem, size = 0x2000, scoped, tag = 'input window, operand 1, single buffered']
    #allocation6 [shape = 's32[1]{0}', space=sflag, size = 0x4, scoped, tag = 'scoped memory for tpu_custom_call.1']
    #allocation7 [shape = 'u8[4096]{0}', space=vmem, size = 0x1000, scoped, tag = 'output window, operand 0, single buffered']
    %7 = vsyncpa [#allocation3], 0
    %8 = vsyncpa [#allocation6], 0
    %9 = vsyncpa [#allocation4], 0
    // Predicated region
    $region2: #{tpu_custom_call.1} parent=1 // pred_check
      _
    $region3: #{tpu_custom_call.1} parent=1 // pred_check_branch
      %11 = sbr.rel (0) target = $region5
    $region4: #{tpu_custom_call.1} parent=1 // pred_region
      %s12 = sadd.s32 0, 0
      %p13 = scmp.lt.s32.totalorder %s12, 0
      %s14 = scalar_select %p13, %s12, 0
      %s15 = smul.u32 2, %s14
      %s17 = ssub.s32 256, 256
      %18 = vsyncadd [#allocation3], %s17
      %s19 = smul.addr %s15, 128
      %s20 = scalar_lea.hbm %s0, %s19
      %s21 = sshll.u32 [#allocation2], 4
      %s22 = int_to_ptr.vmem [resolvable:$true] %s21
      %27 = dma.hbm_to_vmem [thread:$0]  %s20, 256, %s22, [#allocation3], 128, 128, 8
    $region5: #{tpu_custom_call.1} parent=1 // pred_fallthru
      _
    // Predicated region
    $region6: #{tpu_custom_call.1} parent=1 // pred_check
      _
    $region7: #{tpu_custom_call.1} parent=1 // pred_check_branch
      %29 = sbr.rel (0) target = $region9
    $region8: #{tpu_custom_call.1} parent=1 // pred_region
      %s30 = sadd.s32 0, 0
      %p31 = scmp.lt.s32.totalorder %s30, 0
      %s32 = scalar_select %p31, %s30, 0
      %s33 = smul.u32 2, %s32
      %s35 = ssub.s32 256, 256
      %36 = vsyncadd [#allocation6], %s35
      %s37 = smul.addr %s33, 128
      %s38 = scalar_lea.hbm %s1, %s37
      %s39 = sshll.u32 [#allocation5], 4
      %s40 = int_to_ptr.vmem [resolvable:$true] %s39
      %45 = dma.hbm_to_vmem [thread:$0]  %s38, 256, %s40, [#allocation6], 128, 128, 8
    $region9: #{tpu_custom_call.1} parent=1 // pred_fallthru
      _
    // Predicated region
    $region10: #{tpu_custom_call.1} parent=1 // pred_check
      _
    $region11: #{tpu_custom_call.1} parent=1 // pred_check_branch
      %47 = sbr.rel (0) target = $region13
    $region12: #{tpu_custom_call.1} parent=1 // pred_region
      %48 = dma.done [#allocation3], 256
    $region13: #{tpu_custom_call.1} parent=1 // pred_fallthru
      _
    // Predicated region
    $region14: #{tpu_custom_call.1} parent=1 // pred_check
      _
    $region15: #{tpu_custom_call.1} parent=1 // pred_check_branch
      %50 = sbr.rel (0) target = $region17
    $region16: #{tpu_custom_call.1} parent=1 // pred_region
      %51 = dma.done [#allocation6], 256
    $region17: #{tpu_custom_call.1} parent=1 // pred_fallthru
      _
    %s52 = sadd.s32 0, 0
    %p53 = scmp.lt.s32.totalorder %s52, 0
    %s54 = scalar_select %p53, %s52, 0
    %s55 = smul.u32 2, %s54
    %s56 = sadd.s32 0, 0
    %p57 = scmp.lt.s32.totalorder %s56, 0
    %s58 = scalar_select %p57, %s56, 0
    %s59 = smul.u32 2, %s58
    %p60 = scmp.eq.s32.totalorder 0, 0
    // Predicated region
    $region18: #{tpu_custom_call.1} parent=1 // pred_check
      %p61 = pneg %p60
    $region19: #{tpu_custom_call.1} parent=1 // pred_check_branch
      %63 = sbr.rel (%p61) target = $region21
    $region20: #{tpu_custom_call.1} parent=1 // pred_region
      %64 = vst [vmem:[#allocation7] sm:$0xff] 0.0
    $region21: #{tpu_custom_call.1} parent=1 // pred_fallthru
      _
    %v65 = vld [vmem:[#allocation2] sm:$0xff]
    %v66 = vld [vmem:[#allocation2 + $0x8] sm:$0xff]
    %v67 = vld [vmem:[#allocation5] sm:$0xff]
    %v68 = vld [vmem:[#allocation5 + $0x8] sm:$0xff]
    %v69 = vsub.f32 %v65, %v67
    %v70 = vsub.f32 %v66, %v68
    %v71 = vand.u32 2147483647, %v69
    %v72 = vand.u32 2147483647, %v70
    %v73 = vmul.f32 %v71, 0.5
    %v74 = vmul.f32 %v72, 0.5
    %v75 = vadd.f32 %v73, 0.5
    %v76 = vadd.f32 %v74, 0.5
    %v77 = vmul.f32 %v71, %v75
    %v78 = vmul.f32 %v72, %v76
    %v79 = vld [vmem:[#allocation7] sm:$0xff]
    %v80 = vadd.f32 %v77, %v78
    %v81 = vadd.f32 %v79, %v80
    %82 = vst [vmem:[#allocation7] sm:$0xff] %v81
    // Predicated region
    $region22: #{tpu_custom_call.1} parent=1 // pred_check
      _
    $region23: #{tpu_custom_call.1} parent=1 // pred_check_branch
      %84 = sbr.rel (0) target = $region25
    $region24: #{tpu_custom_call.1} parent=1 // pred_region
      %s86 = ssub.s32 128, 128
      %87 = vsyncadd [#allocation4], %s86
      %s89 = sshll.u32 [#allocation7], 4
      %s90 = int_to_ptr.vmem [resolvable:$true] %s89
      %92 = dma.vmem_to_hbm [thread:$0]  %s90, 128, %s2, [#allocation4]
    $region25: #{tpu_custom_call.1} parent=1 // pred_fallthru
      _
    // Predicated region
    $region26: #{tpu_custom_call.1} parent=1 // pred_check
      _
    $region27: #{tpu_custom_call.1} parent=1 // pred_check_branch
      %94 = sbr.rel (0) target = $region29
    $region28: #{tpu_custom_call.1} parent=1 // pred_region
      %95 = dma.done [#allocation4], 128
    $region29: #{tpu_custom_call.1} parent=1 // pred_fallthru
      _
    %96 = vsyncpa [#allocation3], 1
    %97 = vsyncpa [#allocation6], 1
    %98 = vsyncpa [#allocation4], 1

</llo_original>
